<compile_context>
chip_gen: v5e
topology: v5e:2x2
jax: 0.10.0
libtpu: 0.0.40
codegen_flags: <defaults>
</compile_context>

<pallas_src>
import jax
import jax.numpy as jnp
from jax.experimental import pallas as pl
from jax.experimental.pallas import tpu as pltpu


def _similarity_kernel(ex_ref, img_ref, out_ref):
    # ex_ref : (N, C)  exemplar features for one batch element (resident across L tiles)
    # img_ref: (TL, C) image-feature tile for one batch element
    # out_ref: (N, TL) similarity tile, lane-dense on L
    out_ref[...] = jax.lax.dot_general(
        ex_ref[...],
        img_ref[...],
        dimension_numbers=(((1,), (1,)), ((), ())),  # contract C with C, no transpose
        preferred_element_type=jnp.float32,
    )


def _choose_l_tile(L):
    # Prefer a lane-aligned tile (multiple of 128) in the 128..2048 range; for small L
    # fall back to the full extent (legal because it equals the array dimension).
    for tl in (2048, 1024, 512, 256, 128):
        if L % tl == 0:
            return tl
    return L


def exemplar_image_matching(image_features, exemplar_features,
                            compute_dtype=jnp.bfloat16):
    """image_features: (B, L, C); exemplar_features: (B, N, C) -> (B, N, H, W) f32."""
    B, L, C = image_features.shape
    _, N, _ = exemplar_features.shape
    H = W = int(L ** 0.5)
    assert H * W == L, "L must be a perfect square"

    TL = _choose_l_tile(L)
    n_l_tiles = pl.cdiv(L, TL)

    # bf16 inputs at the boundary: kernel is HBM-bound, bf16 halves bytes moved and is
    # the native MXU input dtype on v5e/v6e/v7x. Accumulation stays f32 in the kernel.
    img = image_features.astype(compute_dtype)
    ex = exemplar_features.astype(compute_dtype)

    # Rough per-step VMEM need (double-buffered in/out tiles); raise the scoped limit only
    # when tiles grow past the conservative v5e 16 MiB default.
    in_item = jnp.dtype(compute_dtype).itemsize
    est_vmem = 2 * ((TL * C + N * C) * in_item + N * TL * 4)
    vmem_limit = None
    if est_vmem > 12 * 1024 * 1024:
        vmem_limit = min(int(est_vmem * 2), 96 * 1024 * 1024)

    similarity_nl = pl.pallas_call(
        _similarity_kernel,
        out_shape=jax.ShapeDtypeStruct((B, N, L), jnp.float32),
        grid_spec=pltpu.PrefetchScalarGridSpec(
            num_scalar_prefetch=0,
            grid=(B, n_l_tiles),
            in_specs=[
                # exemplars: batch dim squeezed; same block across the L axis -> resident
                pl.BlockSpec((None, N, C), lambda b, l: (b, 0, 0)),
                # image tile: (TL, C); TL is either full L or a multiple of 128
                pl.BlockSpec((None, TL, C), lambda b, l: (b, l, 0)),
            ],
            # output tile (N, TL): lane dim is L -> dense, unmasked stores
            out_specs=pl.BlockSpec((None, N, TL), lambda b, l: (b, 0, l)),
        ),
        compiler_params=pltpu.CompilerParams(
            dimension_semantics=("parallel", "parallel"),
            vmem_limit_bytes=vmem_limit,
        ),
    )(ex, img)

    # Free reshape only (no transpose): (B, N, L) -> (B, N, H, W)
    return similarity_nl.reshape(B, N, H, W)


def init_matching_network_params(key, embed_dim):
    """Deterministic init of the (unused-in-forward) Conv2d stack parameters."""
    k1, k2, k3 = jax.random.split(key, 3)
    return {
        "conv1_w": jax.random.normal(k1, (embed_dim, embed_dim * 2, 1, 1), jnp.float32) * 0.02,
        "conv1_b": jnp.zeros((embed_dim,), jnp.float32),
        "conv2_w": jax.random.normal(k2, (embed_dim, embed_dim, 3, 3), jnp.float32) * 0.02,
        "conv2_b": jnp.zeros((embed_dim,), jnp.float32),
        "conv3_w": jax.random.normal(k3, (1, embed_dim, 1, 1), jnp.float32) * 0.02,
        "conv3_b": jnp.zeros((1,), jnp.float32),
    }


if __name__ == "__main__":
    key = jax.random.PRNGKey(0)
    k_img, k_ex, k_params = jax.random.split(key, 3)

    # Small shapes: B=2, H=W=8 -> L=64, embed_dim C=32, N=8 exemplars
    B, H, W, C, N = 2, 8, 8, 32, 8
    L = H * W

    image_features = jax.random.normal(k_img, (B, L, C), jnp.float32)
    exemplar_features = jax.random.normal(k_ex, (B, N, C), jnp.float32)

    # Parameters exist in the PyTorch module but are not used in forward().
    _ = init_matching_network_params(k_params, C)

    out = exemplar_image_matching(image_features, exemplar_features)
    jax.block_until_ready(out)
    assert out.shape == (B, N, H, W)

    # Reference: same bf16-rounded inputs, f32 accumulation, same (B, N, L) contraction.
    img_r = image_features.astype(jnp.bfloat16).astype(jnp.float32)
    ex_r = exemplar_features.astype(jnp.bfloat16).astype(jnp.float32)
    ref = jnp.einsum("bnc,blc->bnl", ex_r, img_r).reshape(B, N, H, W)
    assert jnp.allclose(out, ref, atol=1e-2, rtol=1e-2)

    # Sanity check against the full-f32 math (loose tolerance for bf16 input rounding).
    ref_f32 = jnp.einsum("bnc,blc->bnl", exemplar_features, image_features).reshape(B, N, H, W)
    assert jnp.allclose(out, ref_f32, atol=2e-1, rtol=2e-1)

    print("KERNEL_OK")
</pallas_src>

<mosaic_0001>
module attributes {stable_mosaic.version = 11 : i64} {
  func.func @_similarity_kernel(%arg0: i32, %arg1: i32, %arg2: memref<1x8x32xbf16, #tpu.memory_space<vmem>>, %arg3: memref<1x64x32xbf16, #tpu.memory_space<vmem>>, %arg4: memref<1x8x64xf32, #tpu.memory_space<vmem>>) attributes {dimension_semantics = [#tpu.dimension_semantics<parallel>, #tpu.dimension_semantics<parallel>], iteration_bounds = array<i64: 2, 1>, scalar_prefetch = 0 : i64, scratch_operands = 0 : i64, tpu.core_type = #tpu.core_type<tc>, window_params = [{transform_indices = @transform_0, window_bounds = array<i64: 1, 8, 32>}, {transform_indices = @transform_1, window_bounds = array<i64: 1, 64, 32>}, {transform_indices = @transform_2, window_bounds = array<i64: 1, 8, 64>}]} {
    %c0 = arith.constant 0 : index
    %c0_0 = arith.constant 0 : index
    %c0_1 = arith.constant 0 : index
    %0 = vector.load %arg2[%c0, %c0_0, %c0_1] : memref<1x8x32xbf16, #tpu.memory_space<vmem>>, vector<1x8x32xbf16>
    %1 = vector.shape_cast %0 : vector<1x8x32xbf16> to vector<8x32xbf16>
    %c0_2 = arith.constant 0 : index
    %c0_3 = arith.constant 0 : index
    %c0_4 = arith.constant 0 : index
    %2 = vector.load %arg3[%c0_2, %c0_3, %c0_4] : memref<1x64x32xbf16, #tpu.memory_space<vmem>>, vector<1x64x32xbf16>
    %3 = vector.shape_cast %2 : vector<1x64x32xbf16> to vector<64x32xbf16>
    %cst = arith.constant dense<0.000000e+00> : vector<8x64xf32>
    %4 = tpu.matmul %1, %3, %cst {dimension_numbers = #tpu.dot_dimension_numbers<[1], [1], [0], [0], [0, 0, 1, 0], [], []>} : vector<8x32xbf16>, vector<64x32xbf16>, vector<8x64xf32> -> vector<8x64xf32>
    %c0_5 = arith.constant 0 : index
    %c0_6 = arith.constant 0 : index
    %c0_7 = arith.constant 0 : index
    %5 = vector.load %arg4[%c0_5, %c0_6, %c0_7] : memref<1x8x64xf32, #tpu.memory_space<vmem>>, vector<1x8x64xf32>
    %6 = vector.shape_cast %5 : vector<1x8x64xf32> to vector<8x64xf32>
    %7 = vector.shape_cast %4 : vector<8x64xf32> to vector<1x8x64xf32>
    tpu.vector_store %arg4[%c0_5, %c0_6, %c0_7], %7 {strides = array<i32>} : memref<1x8x64xf32, #tpu.memory_space<vmem>>, vector<1x8x64xf32>,
    return
  }
  func.func @transform_0(%arg0: i32, %arg1: i32) -> (i32, i32, i32) {
    %c0_i32 = arith.constant 0 : i32
    %c0_i32_0 = arith.constant 0 : i32
    %c0_i32_1 = arith.constant 0 : i32
    return %arg0, %c0_i32, %c0_i32_0 : i32, i32, i32
  }
  func.func @transform_1(%arg0: i32, %arg1: i32) -> (i32, i32, i32) {
    %c0_i32 = arith.constant 0 : i32
    %c0_i32_0 = arith.constant 0 : i32
    return %arg0, %arg1, %c0_i32 : i32, i32, i32
  }
  func.func @transform_2(%arg0: i32, %arg1: i32) -> (i32, i32, i32) {
    %c0_i32 = arith.constant 0 : i32
    %c0_i32_0 = arith.constant 0 : i32
    return %arg0, %c0_i32, %arg1 : i32, i32, i32
  }
}

</mosaic_0001>

<llo_original>
// kernel: tpu_custom_call.1
$region0: #{tpu_custom_call.1}
  #allocation0 [shape = 'u32[]', space=smem, size = 0x4, offset = 0x4, fixed_abs, tag = 'smem constant byte address 0x4 - core index']
  #allocation1 [shape = 'u32[72,128]{1,0:T(1,128)}', space=vmem, size = 0x9000, scoped, tag = 'internal scratch']
  %s0 = inlined_call_operand.vmem [shape: bf16[2,8,32], index: 0, kind: input, shape index: {}]
  %s1 = inlined_call_operand.vmem [shape: bf16[2,64,32], index: 1, kind: input, shape index: {}]
  %s2 = inlined_call_operand.hbm [shape: f32[2,8,64], index: 2, kind: output, shape index: {}]
  %s3 = sld [smem:[#allocation0]]
  $region41: #{tpu_custom_call.1} parent=0
    _
  %s5 = ssub.s32 1, %s3
  %s6 = scalar_select 0, %s5, %s3
  $region1: #{tpu_custom_call.1} parent=0
    #allocation2 [shape = 'u8[8192]{0}', space=vmem, size = 0x2000, scoped, tag = 'output window, operand 0']
    #allocation3 [shape = 's32[2]{0}', space=sflag, size = 0x8, scoped, tag = 'scoped memory for tpu_custom_call.1']
    %7 = vsyncpa [#allocation3], 0
    %s8 = scalar_lea.sflag [#allocation3], 1
    %9 = vsyncpa %s8, 0
    loop: start=0, step=1, limit=4
    $region2: #{tpu_custom_call.1} parent=1 // loop_pre_header
      _
    $region3: #{tpu_custom_call.1} parent=1 // loop_header
      %s11 = sphi 0, %s15
      %p12 = scmp.ge.s32.totalorder %s11, 4
      %s18 = sphi 0, %s30
      %s19 = sphi 0, %s26
      %s20 = sphi 0, %s18
      %s21 = sphi 0, %s19
      %s22 = sphi 0, %s20
      %s23 = sphi 0, %s21
      %s33 = sphi 0, %s35
      %s36 = sphi 0, %s33
      %s37 = sphi 0, %s36
      %s53 = sphi 0, %s37
      %s61 = sphi 0, %s63
      %s64 = sphi 0, %s61
      %s65 = sphi 0, %s64
      %s81 = sphi 0, %s65
      %s89 = sphi 0, %s91
      %s92 = sphi 0, %s89
      %s93 = sphi 0, %s92
      %s109 = sphi 0, %s93
    $region4: #{tpu_custom_call.1} parent=1 // loop_header_branch
      %14 = sbr.rel (%p12) target = $region8
    $region5: #{tpu_custom_call.1} parent=1 // loop_body
      %s16 = ssub.s32 %s11, 1
      %s17 = ssub.s32 %s11, 2
      %s24 = sadd.s32 1, %s19
      %p25 = scmp.ge.s32.totalorder %s24, 1
      %s26 = scalar_select %p25, 0, %s24
      %s27 = sadd.s32 1, %s18
      %s28 = scalar_select %p25, %s27, %s18
      %p29 = scmp.ge.s32.totalorder %s28, 2
      %s30 = scalar_select %p29, 0, %s28
      %s31 = ssub.s32 %s18, %s30
      %p32 = scmp.eq.s32.totalorder %s31, 0
      %s34 = sadd.s32 %s33, 1
      %s35 = scalar_select %p32, %s33, %s34
      %p38 = pneg %p32
      %p39 = scmp.eq.s32.totalorder %s11, 1
      %p40 = por %p38, %p39
      %p41 = scmp.ne.s32.totalorder %s33, %s36
      %p42 = scmp.eq.s32.totalorder %s11, 0
      %p43 = por %p41, %p42
      %p44 = scmp.ne.s32.totalorder %s33, %s36
      %p45 = scmp.eq.s32.totalorder %s16, 1
      %p46 = por %p44, %p45
      %p47 = scmp.ne.s32.totalorder %s36, %s37
      %p48 = scmp.eq.s32.totalorder %s16, 0
      %p49 = por %p47, %p48
      %p50 = scmp.ne.s32.totalorder %s36, %s37
      %p51 = scmp.eq.s32.totalorder %s17, 1
      %p52 = por %p50, %p51
      %p54 = scmp.ne.s32.totalorder %s37, %s53
      %p55 = scmp.eq.s32.totalorder %s17, 0
      %p56 = por %p54, %p55
      %s57 = ssub.s32 %s18, %s30
      %s58 = ssub.s32 %s19, %s26
      %s59 = sor.u32 %s57, %s58
      %p60 = scmp.eq.s32.totalorder %s59, 0
      %s62 = sadd.s32 %s61, 1
      %s63 = scalar_select %p60, %s61, %s62
      %p66 = pneg %p60
      %p67 = scmp.eq.s32.totalorder %s11, 1
      %p68 = por %p66, %p67
      %p69 = scmp.ne.s32.totalorder %s61, %s64
      %p70 = scmp.eq.s32.totalorder %s11, 0
      %p71 = por %p69, %p70
      %p72 = scmp.ne.s32.totalorder %s61, %s64
      %p73 = scmp.eq.s32.totalorder %s16, 1
      %p74 = por %p72, %p73
      %p75 = scmp.ne.s32.totalorder %s64, %s65
      %p76 = scmp.eq.s32.totalorder %s16, 0
      %p77 = por %p75, %p76
      %p78 = scmp.ne.s32.totalorder %s64, %s65
      %p79 = scmp.eq.s32.totalorder %s17, 1
      %p80 = por %p78, %p79
      %p82 = scmp.ne.s32.totalorder %s65, %s81
      %p83 = scmp.eq.s32.totalorder %s17, 0
      %p84 = por %p82, %p83
      %s85 = ssub.s32 %s18, %s30
      %s86 = ssub.s32 %s19, %s26
      %s87 = sor.u32 %s85, %s86
      %p88 = scmp.eq.s32.totalorder %s87, 0
      %s90 = sadd.s32 %s89, 1
      %s91 = scalar_select %p88, %s89, %s90
      %p94 = pneg %p88
      %p95 = scmp.eq.s32.totalorder %s11, 1
      %p96 = por %p94, %p95
      %p97 = scmp.ne.s32.totalorder %s89, %s92
      %p98 = scmp.eq.s32.totalorder %s11, 0
      %p99 = por %p97, %p98
      %p100 = scmp.ne.s32.totalorder %s89, %s92
      %p101 = scmp.eq.s32.totalorder %s16, 1
      %p102 = por %p100, %p101
      %p103 = scmp.ne.s32.totalorder %s92, %s93
      %p104 = scmp.eq.s32.totalorder %s16, 0
      %p105 = por %p103, %p104
      %p106 = scmp.ne.s32.totalorder %s92, %s93
      %p107 = scmp.eq.s32.totalorder %s17, 1
      %p108 = por %p106, %p107
      %p110 = scmp.ne.s32.totalorder %s93, %s109
      %p111 = scmp.eq.s32.totalorder %s17, 0
      %p112 = por %p110, %p111
      %p113 = scmp.le.s32.totalorder 1, %s11
      %p114 = scmp.lt.s32.totalorder %s11, 3
      %p115 = pnand %p113, %p114
      %p116 = pneg %p115
      // Predicated region
      $region9: #{tpu_custom_call.1} parent=5 // pred_check
        _
      $region10: #{tpu_custom_call.1} parent=5 // pred_check_branch
        %118 = sbr.rel (%p115) target = $region12
      $region11: #{tpu_custom_call.1} parent=5 // pred_region
        %s119 = ssub.s32 %s11, 1
      $region12: #{tpu_custom_call.1} parent=5 // pred_fallthru
        _
      %p120 = scmp.lt.s32.totalorder %s11, 2
      // Predicated region
      $region13: #{tpu_custom_call.1} parent=5 // pred_check
        %p121 = pneg %p120
      $region14: #{tpu_custom_call.1} parent=5 // pred_check_branch
        %123 = sbr.rel (%p121) target = $region16
      $region15: #{tpu_custom_call.1} parent=5 // pred_region
        // Predicated region
        $region17: #{tpu_custom_call.1} parent=15 // pred_check
          %p124 = pneg %p43
        $region18: #{tpu_custom_call.1} parent=15 // pred_check_branch
          %126 = sbr.rel (%p124) target = $region20
        $region19: #{tpu_custom_call.1} parent=15 // pred_region
          %p127 = scmp.lt.s32.totalorder %s18, 1
          %s128 = scalar_select %p127, %s18, 1
          %s129 = smul.addr %s128, 4
          %s130 = scalar_lea.vmem %s0, %s129
        $region20: #{tpu_custom_call.1} parent=15 // pred_fallthru
          _
        // Predicated region
        $region21: #{tpu_custom_call.1} parent=15 // pred_check
          %p131 = pneg %p71
        $region22: #{tpu_custom_call.1} parent=15 // pred_check_branch
          %133 = sbr.rel (%p131) target = $region24
        $region23: #{tpu_custom_call.1} parent=15 // pred_region
          %s134 = smul.u32 8, %s19
          %p135 = scmp.lt.s32.totalorder %s18, 1
          %s136 = scalar_select %p135, %s18, 1
          %p137 = scmp.lt.s32.totalorder %s134, 7
          %s138 = scalar_select %p137, %s134, 7
          %s139 = smul.addr %s136, 8
          %s140 = sadd.s32 %s138, %s139
          %s141 = smul.addr %s140, 4
          %s142 = scalar_lea.vmem %s1, %s141
          %s143 = smul.u32 8, %s19
        $region24: #{tpu_custom_call.1} parent=15 // pred_fallthru
          _
      $region16: #{tpu_custom_call.1} parent=5 // pred_fallthru
        _
      %p144 = scmp.le.s32.totalorder 1, %s11
      %p145 = scmp.lt.s32.totalorder %s11, 3
      %p146 = pnand %p144, %p145
      %p147 = pneg %p146
      // Predicated region
      $region25: #{tpu_custom_call.1} parent=5 // pred_check
        _
      $region26: #{tpu_custom_call.1} parent=5 // pred_check_branch
        %149 = sbr.rel (%p146) target = $region28
      $region27: #{tpu_custom_call.1} parent=5 // pred_region
        %s150 = ssub.s32 %s11, 1
        %p151 = scmp.lt.s32.totalorder %s20, 1
        %s152 = scalar_select %p151, %s20, 1
        %s153 = smul.addr %s152, 4
        %s154 = scalar_lea.vmem %s0, %s153
        %p155 = pneg %p49
        %p156 = pneg %p46
        %s157 = smul.u32 8, %s21
        %p158 = scmp.lt.s32.totalorder %s20, 1
        %s159 = scalar_select %p158, %s20, 1
        %p160 = scmp.lt.s32.totalorder %s157, 7
        %s161 = scalar_select %p160, %s157, 7
        %s162 = smul.addr %s159, 8
        %s163 = sadd.s32 %s161, %s162
        %s164 = smul.addr %s163, 4
        %s165 = scalar_lea.vmem %s1, %s164
        %p166 = pneg %p77
        %p167 = pneg %p74
        %p168 = pneg %p105
        %p169 = pneg %p102
        %s170 = sand.u32 %s92, 1
        %s171 = scalar_lea.sflag [#allocation3], %s170
        %s172 = sand.u32 %s92, 1
        %s173 = smul.addr %s172, 8
        %s174 = scalar_lea.vmem [#allocation2], %s173
        %p175 = scmp.lt.s32.totalorder %s20, 1
        %s176 = scalar_select %p175, %s20, 1
        %s177 = smul.addr %s176, 4
        %s178 = scalar_lea.vmem %s0, %s177
        %s179 = smul.u32 8, %s21
        %p180 = scmp.lt.s32.totalorder %s20, 1
        %s181 = scalar_select %p180, %s20, 1
        %p182 = scmp.lt.s32.totalorder %s179, 7
        %s183 = scalar_select %p182, %s179, 7
        %s184 = smul.addr %s181, 8
        %s185 = sadd.s32 %s183, %s184
        %s186 = smul.addr %s185, 4
        %s187 = scalar_lea.vmem %s1, %s186
        %s188 = smul.u32 8, %s21
        %v190 = vld [vmem:[%s178] sm:$0xf]
        %v191 = vld [vmem:[%s187] sm:$0xf]
        %v192 = vld [vmem:[%s187 + $0x4] sm:$0xf]
        %v193 = vld [vmem:[%s187 + $0x8] sm:$0xf]
        %v194 = vld [vmem:[%s187 + $0xc] sm:$0xf]
        %v195 = vld [vmem:[%s187 + $0x10] sm:$0xf]
        %v196 = vld [vmem:[%s187 + $0x14] sm:$0xf]
        %v197 = vld [vmem:[%s187 + $0x18] sm:$0xf]
        %v198 = vld [vmem:[%s187 + $0x1c] sm:$0xf]
        %v207 = vunpack.c.l.b16 %v191
        %v208 = vunpack.c.l.b16 %v192
        %v209 = vunpack.c.l.b16 %v193
        %v210 = vunpack.c.l.b16 %v194
        %v211 = vunpack.c.l.b16 %v195
        %v212 = vunpack.c.l.b16 %v196
        %v213 = vunpack.c.l.b16 %v197
        %v214 = vunpack.c.l.b16 %v198
        %v215 = vpack.c.b16 %v208, %v207
        %v216 = vpack.c.b16 %v210, %v209
        %v217 = vpack.c.b16 %v212, %v211
        %v218 = vpack.c.b16 %v214, %v213
        %vm219 = vcmask 261120
        %v221 = vsel %vm219, %v190, 0
        %v224 = vsel %vm219, %v215, 0
        %v227 = vsel %vm219, %v216, 0
        %v230 = vsel %vm219, %v217, 0
        %v233 = vsel %vm219, %v218, 0
        %235 = vmatpush.bf16.xpose.msra.mxu0 0
        %236 = vmatpush.bf16.xpose.msra.mxu0 0
        %237 = vmatpush.bf16.xpose.msra.mxu0 0
        %238 = vmatpush.bf16.xpose.msra.mxu0 0
        %239 = vmatpush.bf16.xpose.msra.mxu0 %v233
        %240 = vmatpush.bf16.xpose.msra.mxu0 %v230
        %241 = vmatpush.bf16.xpose.msra.mxu0 %v227
        %242 = vmatpush.bf16.xpose.msra.mxu0 %v224
        %243 = vmatmul.bf16.gmra.mxu0 %v221
        %v244 = vpop.f32.mrf.mxu0
        %v245 = vadd.f32 0.0, %v244
        %v246 = vpop.f32.mrf.mxu0
        %247 = vdwg.mxu0
        %vm248 = vcmask 523264
        %249 = vst.msk [vmem:[%s174] sm:$0xff] %vm248, %v245
        %s250 = sand.u32 %s92, 1
        %s251 = scalar_lea.sflag [#allocation3], %s250
        %s252 = sand.u32 %s92, 1
        %s253 = smul.addr %s252, 8
        %s254 = scalar_lea.vmem [#allocation2], %s253
        // Predicated region
        $region29: #{tpu_custom_call.1} parent=27 // pred_check
          %p255 = pneg %p102
        $region30: #{tpu_custom_call.1} parent=27 // pred_check_branch
          %257 = sbr.rel (%p255) target = $region32
        $region31: #{tpu_custom_call.1} parent=27 // pred_region
          %259 = vsyncadd %s251, 0
          %s260 = sadd.s32 %s21, %s20
          %s261 = smul.addr %s260, 8
          %s262 = scalar_lea.hbm %s2, %s261
          %s264 = sshll.u32 %s254, 4
          %s265 = int_to_ptr.vmem [resolvable:$true] %s264
          %s266 = sshll.u32 %s262, 4
          %s267 = int_to_ptr.hbm [resolvable:$true] %s266
          %269 = dma.vmem_to_hbm [thread:$0]  %s265, 128, %s267, %s251
        $region32: #{tpu_custom_call.1} parent=27 // pred_fallthru
          _
      $region28: #{tpu_custom_call.1} parent=5 // pred_fallthru
        _
      %p270 = scmp.le.s32.totalorder 2, %s11
      // Predicated region
      $region33: #{tpu_custom_call.1} parent=5 // pred_check
        %p271 = pneg %p270
      $region34: #{tpu_custom_call.1} parent=5 // pred_check_branch
        %273 = sbr.rel (%p271) target = $region36
      $region35: #{tpu_custom_call.1} parent=5 // pred_region
        %s274 = ssub.s32 %s11, 2
        // Predicated region
        $region37: #{tpu_custom_call.1} parent=35 // pred_check
          %p275 = pneg %p108
        $region38: #{tpu_custom_call.1} parent=35 // pred_check_branch
          %277 = sbr.rel (%p275) target = $region40
        $region39: #{tpu_custom_call.1} parent=35 // pred_region
          %s278 = sand.u32 %s93, 1
          %s279 = scalar_lea.sflag [#allocation3], %s278
          %s280 = sand.u32 %s93, 1
          %s281 = smul.addr %s280, 8
          %s282 = scalar_lea.vmem [#allocation2], %s281
          %284 = dma.done %s279, 128
        $region40: #{tpu_custom_call.1} parent=35 // pred_fallthru
          _
      $region36: #{tpu_custom_call.1} parent=5 // pred_fallthru
        _
    $region6: #{tpu_custom_call.1} parent=1 // loop_footer
      %s15 = sadd.s32 1, %s11
    $region7: #{tpu_custom_call.1} parent=1 // loop_footer_branch
      %10 = sbr.rel target = $region3
    $region8: #{tpu_custom_call.1} parent=1 // loop_exit
      _
    %285 = vsyncpa [#allocation3], 1
    %s286 = scalar_lea.sflag [#allocation3], 1
    %287 = vsyncpa %s286, 1

</llo_original>
